<compile_context>
chip_gen: v7x
topology: tpu7x:2x2x1
jax: 0.10.0
libtpu: 0.0.40
codegen_flags: <defaults>
</compile_context>

<pallas_src>
import functools
import math

import jax
import jax.numpy as jnp
from jax.experimental import pallas as pl
from jax.experimental.pallas import tpu as pltpu


# ----------------------------- Pallas kernel -------------------------------
def deepfm_kernel(dense_ref, w0_ref, b0_ref, w1_ref, b1_ref, w2_ref, b2_ref,
                  wout_ref, out_ref, *, num_fields, factor_dim, fm_chunk):
    # dense_ref : (F*D, TB)  bf16 embeddings, batch on lanes
    # w*_ref    : (H, K)     bf16 PyTorch-orientation weights (unpadded H=32)
    # b*_ref    : (H, 1)     f32 bias columns
    # wout_ref  : (H, 1)     f32 final projection column
    # out_ref   : (1, TB)    f32 y_pair + y_dnn (FM linear added in wrapper)
    D = factor_dim
    TB = out_ref.shape[1]

    # ---- FM pairwise: 0.5 * sum_d[(sum_f v)^2 - sum_f v^2]  -> (1, TB)
    # f32 accumulation (v5e VPU has no bf16; difference is cancellation-prone).
    # Lane-chunked so s/sq/v live vregs stay bounded at large TB.
    parts = []
    for c in range(0, TB, fm_chunk):
        v0 = dense_ref[0:D, c:c + fm_chunk].astype(jnp.float32)
        s = v0
        sq = v0 * v0
        for f in range(1, num_fields):                      # short, unrolled
            v = dense_ref[f * D:(f + 1) * D, c:c + fm_chunk].astype(jnp.float32)
            s = s + v
            sq = sq + v * v
        parts.append(0.5 * jnp.sum(s * s - sq, axis=0, keepdims=True))
    y_pair = parts[0] if len(parts) == 1 else jnp.concatenate(parts, axis=1)

    # ---- DNN: 3x (Linear + ReLU) in bf16 with f32 accumulate, then the H->1
    # projection as a VPU multiply + sublane reduce (no N=1 MXU matmul).
    h = jnp.dot(w0_ref[...], dense_ref[...],
                preferred_element_type=jnp.float32)          # (H, TB) f32
    h = jnp.maximum(h + b0_ref[...], 0.0).astype(jnp.bfloat16)
    h = jnp.dot(w1_ref[...], h, preferred_element_type=jnp.float32)
    h = jnp.maximum(h + b1_ref[...], 0.0).astype(jnp.bfloat16)
    h = jnp.dot(w2_ref[...], h, preferred_element_type=jnp.float32)
    h = jnp.maximum(h + b2_ref[...], 0.0)                    # f32 for reduce
    y_dnn = jnp.sum(h * wout_ref[...], axis=0, keepdims=True)   # (1, TB)

    out_ref[...] = y_pair + y_dnn                            # lane-dense row


# ------------------------------ helpers -------------------------------------
def _round_up(n, m):
    return ((n + m - 1) // m) * m


def _choose_tile(batch):
    # Largest lane tile that still leaves >= 2 grid steps (v7x has 2 TCs
    # sharing the grid) and keeps padding waste under one tile.  VMEM is never
    # the constraint for this kernel on v5e/v6e/v7x.
    for tb in (2048, 1024, 512, 256):
        if batch >= 2 * tb:
            return tb
    return 128


# ------------------------------ wrapper -------------------------------------
def deepfm_forward(x, embeddings, params):
    """x: (B, num_fields) int32 raw per-field indices."""
    B, F = x.shape
    D = embeddings[0].shape[1]
    H = params["w0"].shape[0]
    FD = F * D

    # ---- glue: embedding gather built directly in (FD, B) layout so batch
    # sits on lanes — no (B, FD) -> (FD, B) transpose pass over HBM.
    cols = [jnp.take(embeddings[f].T.astype(jnp.bfloat16), x[:, f], axis=1)
            for f in range(F)]                               # each (D, B)
    dense_slab = jnp.concatenate(cols, axis=0)               # (FD, B) bf16

    # ---- glue: FM linear term.  torch .scatter_(1, x, 1.0) SETS duplicates
    # to 1.0, so fm_w rows that alias across fields must only count once.
    w_rows = jnp.take(params["fm_w"], x, axis=0)             # (B, F)
    mask_cols = [jnp.ones((B,), jnp.float32)]
    for f in range(1, F):
        m = jnp.ones((B,), bool)
        for g in range(f):
            m = m & (x[:, g] != x[:, f])
        mask_cols.append(m.astype(jnp.float32))
    dedup = jnp.stack(mask_cols, axis=1)                     # (B, F)
    y_lin = jnp.sum(w_rows * dedup, axis=1) + params["fm_b"]  # (B,) f32

    # ---- pad batch (lanes) to a tile multiple
    TB = _choose_tile(B)
    B_pad = _round_up(B, TB)
    dense_slab = jnp.pad(dense_slab, ((0, 0), (0, B_pad - B)))   # (FD, B_pad)

    # ---- weights: bf16 for MXU inputs, f32 for bias / output-projection cols
    w0 = params["w0"].astype(jnp.bfloat16)                   # (H, FD)
    w1 = params["w1"].astype(jnp.bfloat16)                   # (H, H)
    w2 = params["w2"].astype(jnp.bfloat16)                   # (H, H)
    b0 = params["b0"].reshape(H, 1)
    b1 = params["b1"].reshape(H, 1)
    b2 = params["b2"].reshape(H, 1)
    wout = params["wout"].reshape(H, 1)

    kernel = functools.partial(deepfm_kernel, num_fields=F, factor_dim=D,
                               fm_chunk=min(TB, 512))
    const = lambda shape: pl.BlockSpec(shape, lambda i: (0, 0))

    out = pl.pallas_call(
        kernel,
        out_shape=jax.ShapeDtypeStruct((1, B_pad), jnp.float32),
        grid=(B_pad // TB,),
        in_specs=[
            pl.BlockSpec((FD, TB), lambda i: (0, i)),   # streamed embeddings
            const((H, FD)), const((H, 1)),              # w0, b0
            const((H, H)), const((H, 1)),               # w1, b1
            const((H, H)), const((H, 1)),               # w2, b2
            const((H, 1)),                              # wout
        ],
        out_specs=pl.BlockSpec((1, TB), lambda i: (0, i)),
        compiler_params=pltpu.CompilerParams(
            dimension_semantics=("parallel",)),
    )(dense_slab, w0, b0, w1, b1, w2, b2, wout)

    return out[0, :B] + y_lin                                # (B,)


# --------------------------- parameter init ----------------------------------
def init_params(key, field_dims, factor_dim, hidden):
    num_fields = len(field_dims)
    input_dim = sum(field_dims)
    dnn_in = num_fields * factor_dim
    keys = jax.random.split(key, 16)
    ki = iter(range(16))

    # embeddings: xavier_uniform, shape (field_dims[f], factor_dim)
    embeddings = []
    for fd in field_dims:
        bound = math.sqrt(6.0 / (fd + factor_dim))
        embeddings.append(jax.random.uniform(
            keys[next(ki)], (fd, factor_dim), jnp.float32, -bound, bound))

    # FM linear: weight ~ N(0, 0.01), bias = 0
    fm_w = 0.01 * jax.random.normal(keys[next(ki)], (input_dim,), jnp.float32)
    fm_b = jnp.zeros((), jnp.float32)

    def kaiming_uniform(k, fan_out, fan_in):
        bound = math.sqrt(6.0 / fan_in)      # gain sqrt(2) * sqrt(3/fan_in)
        # PyTorch layout: (out_features, in_features)
        return jax.random.uniform(k, (fan_out, fan_in), jnp.float32, -bound, bound)

    w0 = kaiming_uniform(keys[next(ki)], hidden, dnn_in)
    w1 = kaiming_uniform(keys[next(ki)], hidden, hidden)
    w2 = kaiming_uniform(keys[next(ki)], hidden, hidden)
    wout = kaiming_uniform(keys[next(ki)], 1, hidden)[0]          # (hidden,)
    b0 = jnp.zeros((hidden,), jnp.float32)
    b1 = jnp.zeros((hidden,), jnp.float32)
    b2 = jnp.zeros((hidden,), jnp.float32)

    params = dict(fm_w=fm_w, fm_b=fm_b,
                  w0=w0, b0=b0, w1=w1, b1=b1, w2=w2, b2=b2, wout=wout)
    return embeddings, params


# ---------------------------- pure-JAX reference ------------------------------
def reference_forward(x, embeddings, params, input_dim):
    """Mirrors the PyTorch module exactly (incl. raw-index one-hot scatter)."""
    B, F = x.shape
    sparse = jnp.zeros((B, input_dim), jnp.float32)
    sparse = sparse.at[jnp.arange(B)[:, None], x].set(1.0)
    y_lin = sparse @ params["fm_w"] + params["fm_b"]               # (B,)

    dense = jnp.stack(
        [jnp.take(embeddings[f], x[:, f], axis=0) for f in range(F)], axis=1)
    s = jnp.sum(dense, axis=1)
    y_pair = 0.5 * jnp.sum(s * s - jnp.sum(dense * dense, axis=1), axis=1)

    h = dense.reshape(B, -1)
    h = jnp.maximum(h @ params["w0"].T + params["b0"], 0.0)
    h = jnp.maximum(h @ params["w1"].T + params["b1"], 0.0)
    h = jnp.maximum(h @ params["w2"].T + params["b2"], 0.0)
    y_dnn = h @ params["wout"]
    return y_lin + y_pair + y_dnn


def _quantize_like_kernel(embeddings, params):
    """Same bf16 quantization the kernel applies (f32 math otherwise)."""
    embq = [e.astype(jnp.bfloat16).astype(jnp.float32) for e in embeddings]
    pq = dict(params)
    for k in ("w0", "w1", "w2"):
        pq[k] = params[k].astype(jnp.bfloat16).astype(jnp.float32)
    return embq, pq


# ------------------------------ main -----------------------------------------
if __name__ == "__main__":
    # small config consistent with DeepFM.__init__
    field_dims = [12, 20, 8, 24]          # data['field_dims']
    factor_dim = 16                       # args.factor_dim
    hidden = 32                           # args.dnn_hidden_units -> [32, 32, 32]
    B = 8
    input_dim = sum(field_dims)

    key = jax.random.PRNGKey(0)
    k_param, k_x = jax.random.split(key)
    embeddings, params = init_params(k_param, field_dims, factor_dim, hidden)

    # x: (B, num_fields) int indices, each entry in [0, field_dims[f])
    cols = []
    for f, fd in enumerate(field_dims):
        k_x, kf = jax.random.split(k_x)
        cols.append(jax.random.randint(kf, (B,), 0, fd, jnp.int32))
    x = jnp.stack(cols, axis=1)

    y = deepfm_forward(x, embeddings, params)
    jax.block_until_ready(y)
    assert y.shape == (B,)

    # (1) kernel math vs. an identically-quantized (bf16 params) f32 reference
    embq, pq = _quantize_like_kernel(embeddings, params)
    y_ref_q = reference_forward(x, embq, pq, input_dim)
    assert jnp.allclose(y, y_ref_q, rtol=2e-3, atol=2e-3), (y, y_ref_q)

    # (2) sanity: bf16 inference stays close to the full-f32 module output
    y_ref = reference_forward(x, embeddings, params, input_dim)
    assert jnp.allclose(y, y_ref, rtol=5e-2, atol=5e-2), (y, y_ref)

    print("KERNEL_OK")
</pallas_src>

<mosaic_0001>
module attributes {stable_mosaic.version = 11 : i64} {
  func.func @deepfm_kernel(%arg0: i32, %arg1: memref<64x128xbf16, #tpu.memory_space<vmem>>, %arg2: memref<32x64xbf16, #tpu.memory_space<vmem>>, %arg3: memref<32x1xf32, #tpu.memory_space<vmem>>, %arg4: memref<32x32xbf16, #tpu.memory_space<vmem>>, %arg5: memref<32x1xf32, #tpu.memory_space<vmem>>, %arg6: memref<32x32xbf16, #tpu.memory_space<vmem>>, %arg7: memref<32x1xf32, #tpu.memory_space<vmem>>, %arg8: memref<32x1xf32, #tpu.memory_space<vmem>>, %arg9: memref<1x128xf32, #tpu.memory_space<vmem>>) attributes {dimension_semantics = [#tpu.dimension_semantics<parallel>], iteration_bounds = array<i64: 1>, scalar_prefetch = 0 : i64, scratch_operands = 0 : i64, tpu.core_type = #tpu.core_type<tc>, window_params = [{transform_indices = @transform_0, window_bounds = array<i64: 64, 128>}, {pipeline_mode = #tpu.pipeline_mode<synchronous>, transform_indices = @transform_1, window_bounds = array<i64: 32, 64>}, {pipeline_mode = #tpu.pipeline_mode<synchronous>, transform_indices = @transform_2, window_bounds = array<i64: 32, 1>}, {pipeline_mode = #tpu.pipeline_mode<synchronous>, transform_indices = @transform_3, window_bounds = array<i64: 32, 32>}, {pipeline_mode = #tpu.pipeline_mode<synchronous>, transform_indices = @transform_4, window_bounds = array<i64: 32, 1>}, {pipeline_mode = #tpu.pipeline_mode<synchronous>, transform_indices = @transform_5, window_bounds = array<i64: 32, 32>}, {pipeline_mode = #tpu.pipeline_mode<synchronous>, transform_indices = @transform_6, window_bounds = array<i64: 32, 1>}, {pipeline_mode = #tpu.pipeline_mode<synchronous>, transform_indices = @transform_7, window_bounds = array<i64: 32, 1>}, {transform_indices = @transform_8, window_bounds = array<i64: 1, 128>}]} {
    %c0 = arith.constant 0 : index
    %c0_0 = arith.constant 0 : index
    %0 = vector.load %arg1[%c0, %c0_0] : memref<64x128xbf16, #tpu.memory_space<vmem>>, vector<16x128xbf16>
    %1 = arith.extf %0 : vector<16x128xbf16> to vector<16x128xf32>
    %2 = arith.mulf %1, %1 : vector<16x128xf32>
    %c16 = arith.constant 16 : index
    %c0_1 = arith.constant 0 : index
    %3 = vector.load %arg1[%c16, %c0_1] : memref<64x128xbf16, #tpu.memory_space<vmem>>, vector<16x128xbf16>
    %4 = arith.extf %3 : vector<16x128xbf16> to vector<16x128xf32>
    %5 = arith.addf %1, %4 : vector<16x128xf32>
    %6 = arith.mulf %4, %4 : vector<16x128xf32>
    %7 = arith.addf %2, %6 : vector<16x128xf32>
    %c32 = arith.constant 32 : index
    %c0_2 = arith.constant 0 : index
    %8 = vector.load %arg1[%c32, %c0_2] : memref<64x128xbf16, #tpu.memory_space<vmem>>, vector<16x128xbf16>
    %9 = arith.extf %8 : vector<16x128xbf16> to vector<16x128xf32>
    %10 = arith.addf %5, %9 : vector<16x128xf32>
    %11 = arith.mulf %9, %9 : vector<16x128xf32>
    %12 = arith.addf %7, %11 : vector<16x128xf32>
    %c48 = arith.constant 48 : index
    %c0_3 = arith.constant 0 : index
    %13 = vector.load %arg1[%c48, %c0_3] : memref<64x128xbf16, #tpu.memory_space<vmem>>, vector<16x128xbf16>
    %14 = arith.extf %13 : vector<16x128xbf16> to vector<16x128xf32>
    %15 = arith.addf %10, %14 : vector<16x128xf32>
    %16 = arith.mulf %14, %14 : vector<16x128xf32>
    %17 = arith.addf %12, %16 : vector<16x128xf32>
    %18 = arith.mulf %15, %15 : vector<16x128xf32>
    %19 = arith.subf %18, %17 : vector<16x128xf32>
    %cst = arith.constant dense<0.000000e+00> : vector<128xf32>
    %20 = vector.multi_reduction <add>, %19, %cst [0] : vector<16x128xf32> to vector<128xf32>
    %21 = vector.shape_cast %20 : vector<128xf32> to vector<1x128xf32>
    %cst_4 = arith.constant 5.000000e-01 : f32
    %22 = vector.broadcast %cst_4 : f32 to vector<1x128xf32>
    %23 = arith.mulf %22, %21 : vector<1x128xf32>
    %c0_5 = arith.constant 0 : index
    %c0_6 = arith.constant 0 : index
    %24 = vector.load %arg2[%c0_5, %c0_6] : memref<32x64xbf16, #tpu.memory_space<vmem>>, vector<32x64xbf16>
    %c0_7 = arith.constant 0 : index
    %c0_8 = arith.constant 0 : index
    %25 = vector.load %arg1[%c0_7, %c0_8] : memref<64x128xbf16, #tpu.memory_space<vmem>>, vector<64x128xbf16>
    %cst_9 = arith.constant dense<0.000000e+00> : vector<32x128xf32>
    %26 = tpu.matmul %24, %25, %cst_9 {dimension_numbers = #tpu.dot_dimension_numbers<[1], [0], [0], [1], [0, 0, 1, 1], [], []>} : vector<32x64xbf16>, vector<64x128xbf16>, vector<32x128xf32> -> vector<32x128xf32>
    %c0_10 = arith.constant 0 : index
    %c0_11 = arith.constant 0 : index
    %27 = vector.load %arg3[%c0_10, %c0_11] : memref<32x1xf32, #tpu.memory_space<vmem>>, vector<32x1xf32>
    %28 = vector.broadcast %27 : vector<32x1xf32> to vector<32x128xf32>
    %29 = arith.addf %26, %28 : vector<32x128xf32>
    %cst_12 = arith.constant 0.000000e+00 : f32
    %30 = vector.broadcast %cst_12 : f32 to vector<32x128xf32>
    %31 = arith.maximumf %29, %30 : vector<32x128xf32>
    %32 = arith.truncf %31 : vector<32x128xf32> to vector<32x128xbf16>
    %c0_13 = arith.constant 0 : index
    %c0_14 = arith.constant 0 : index
    %33 = vector.load %arg4[%c0_13, %c0_14] : memref<32x32xbf16, #tpu.memory_space<vmem>>, vector<32x32xbf16>
    %cst_15 = arith.constant dense<0.000000e+00> : vector<32x128xf32>
    %34 = tpu.matmul %33, %32, %cst_15 {dimension_numbers = #tpu.dot_dimension_numbers<[1], [0], [0], [1], [0, 0, 1, 1], [], []>} : vector<32x32xbf16>, vector<32x128xbf16>, vector<32x128xf32> -> vector<32x128xf32>
    %c0_16 = arith.constant 0 : index
    %c0_17 = arith.constant 0 : index
    %35 = vector.load %arg5[%c0_16, %c0_17] : memref<32x1xf32, #tpu.memory_space<vmem>>, vector<32x1xf32>
    %36 = vector.broadcast %35 : vector<32x1xf32> to vector<32x128xf32>
    %37 = arith.addf %34, %36 : vector<32x128xf32>
    %cst_18 = arith.constant 0.000000e+00 : f32
    %38 = vector.broadcast %cst_18 : f32 to vector<32x128xf32>
    %39 = arith.maximumf %37, %38 : vector<32x128xf32>
    %40 = arith.truncf %39 : vector<32x128xf32> to vector<32x128xbf16>
    %c0_19 = arith.constant 0 : index
    %c0_20 = arith.constant 0 : index
    %41 = vector.load %arg6[%c0_19, %c0_20] : memref<32x32xbf16, #tpu.memory_space<vmem>>, vector<32x32xbf16>
    %cst_21 = arith.constant dense<0.000000e+00> : vector<32x128xf32>
    %42 = tpu.matmul %41, %40, %cst_21 {dimension_numbers = #tpu.dot_dimension_numbers<[1], [0], [0], [1], [0, 0, 1, 1], [], []>} : vector<32x32xbf16>, vector<32x128xbf16>, vector<32x128xf32> -> vector<32x128xf32>
    %c0_22 = arith.constant 0 : index
    %c0_23 = arith.constant 0 : index
    %43 = vector.load %arg7[%c0_22, %c0_23] : memref<32x1xf32, #tpu.memory_space<vmem>>, vector<32x1xf32>
    %44 = vector.broadcast %43 : vector<32x1xf32> to vector<32x128xf32>
    %45 = arith.addf %42, %44 : vector<32x128xf32>
    %cst_24 = arith.constant 0.000000e+00 : f32
    %46 = vector.broadcast %cst_24 : f32 to vector<32x128xf32>
    %47 = arith.maximumf %45, %46 : vector<32x128xf32>
    %c0_25 = arith.constant 0 : index
    %c0_26 = arith.constant 0 : index
    %48 = vector.load %arg8[%c0_25, %c0_26] : memref<32x1xf32, #tpu.memory_space<vmem>>, vector<32x1xf32>
    %49 = vector.broadcast %48 : vector<32x1xf32> to vector<32x128xf32>
    %50 = arith.mulf %47, %49 : vector<32x128xf32>
    %cst_27 = arith.constant dense<0.000000e+00> : vector<128xf32>
    %51 = vector.multi_reduction <add>, %50, %cst_27 [0] : vector<32x128xf32> to vector<128xf32>
    %52 = vector.shape_cast %51 : vector<128xf32> to vector<1x128xf32>
    %53 = arith.addf %23, %52 : vector<1x128xf32>
    %c0_28 = arith.constant 0 : index
    %c0_29 = arith.constant 0 : index
    %54 = vector.load %arg9[%c0_28, %c0_29] : memref<1x128xf32, #tpu.memory_space<vmem>>, vector<1x128xf32>
    tpu.vector_store %arg9[%c0_28, %c0_29], %53 {strides = array<i32>} : memref<1x128xf32, #tpu.memory_space<vmem>>, vector<1x128xf32>,
    return
  }
  func.func @transform_0(%arg0: i32) -> (i32, i32) {
    %c0_i32 = arith.constant 0 : i32
    %c0_i32_0 = arith.constant 0 : i32
    return %c0_i32, %arg0 : i32, i32
  }
  func.func @transform_1(%arg0: i32) -> (i32, i32) {
    %c0_i32 = arith.constant 0 : i32
    %c0_i32_0 = arith.constant 0 : i32
    %c0_i32_1 = arith.constant 0 : i32
    return %c0_i32, %c0_i32_0 : i32, i32
  }
  func.func @transform_2(%arg0: i32) -> (i32, i32) {
    %c0_i32 = arith.constant 0 : i32
    %c0_i32_0 = arith.constant 0 : i32
    %c0_i32_1 = arith.constant 0 : i32
    return %c0_i32, %c0_i32_0 : i32, i32
  }
  func.func @transform_3(%arg0: i32) -> (i32, i32) {
    %c0_i32 = arith.constant 0 : i32
    %c0_i32_0 = arith.constant 0 : i32
    %c0_i32_1 = arith.constant 0 : i32
    return %c0_i32, %c0_i32_0 : i32, i32
  }
  func.func @transform_4(%arg0: i32) -> (i32, i32) {
    %c0_i32 = arith.constant 0 : i32
    %c0_i32_0 = arith.constant 0 : i32
    %c0_i32_1 = arith.constant 0 : i32
    return %c0_i32, %c0_i32_0 : i32, i32
  }
  func.func @transform_5(%arg0: i32) -> (i32, i32) {
    %c0_i32 = arith.constant 0 : i32
    %c0_i32_0 = arith.constant 0 : i32
    %c0_i32_1 = arith.constant 0 : i32
    return %c0_i32, %c0_i32_0 : i32, i32
  }
  func.func @transform_6(%arg0: i32) -> (i32, i32) {
    %c0_i32 = arith.constant 0 : i32
    %c0_i32_0 = arith.constant 0 : i32
    %c0_i32_1 = arith.constant 0 : i32
    return %c0_i32, %c0_i32_0 : i32, i32
  }
  func.func @transform_7(%arg0: i32) -> (i32, i32) {
    %c0_i32 = arith.constant 0 : i32
    %c0_i32_0 = arith.constant 0 : i32
    %c0_i32_1 = arith.constant 0 : i32
    return %c0_i32, %c0_i32_0 : i32, i32
  }
  func.func @transform_8(%arg0: i32) -> (i32, i32) {
    %c0_i32 = arith.constant 0 : i32
    %c0_i32_0 = arith.constant 0 : i32
    return %c0_i32, %arg0 : i32, i32
  }
}

</mosaic_0001>

<llo_original>
// kernel: tpu_custom_call.1
$region0: #{tpu_custom_call.1}
  #allocation0 [shape = 'u32[]', space=smem, size = 0x4, offset = 0x4, fixed_abs, tag = 'smem constant byte address 0x4 - core index']
  #allocation1 [shape = 'u32[144,128]{1,0:T(1,128)}', space=vmem, size = 0x12000, scoped, tag = 'internal scratch']
  %s0 = inlined_call_operand.vmem [shape: bf16[64,128], index: 0, kind: input, shape index: {}]
  %s1 = inlined_call_operand.vmem [shape: bf16[32,64], index: 1, kind: input, shape index: {}]
  %s2 = inlined_call_operand.vmem [shape: f32[32,1], index: 2, kind: input, shape index: {}]
  %s3 = inlined_call_operand.vmem [shape: bf16[32,32], index: 3, kind: input, shape index: {}]
  %s4 = inlined_call_operand.vmem [shape: f32[32,1], index: 4, kind: input, shape index: {}]
  %s5 = inlined_call_operand.vmem [shape: bf16[32,32], index: 5, kind: input, shape index: {}]
  %s6 = inlined_call_operand.vmem [shape: f32[32,1], index: 6, kind: input, shape index: {}]
  %s7 = inlined_call_operand.vmem [shape: f32[32,1], index: 7, kind: input, shape index: {}]
  %s8 = inlined_call_operand.hbm [shape: f32[1,128], index: 8, kind: output, shape index: {}]
  %s9 = sld [smem:[#allocation0]]
  $region42: #{tpu_custom_call.1} parent=0
    _
  %s11 = ssub.s32 1, %s9
  %s12 = scalar_select 0, %s11, %s9
  $region1: #{tpu_custom_call.1} parent=0
    #allocation2 [shape = 'u8[512]{0}', space=vmem, size = 0x400, scoped, tag = 'output window, operand 0, single buffered']
    #allocation3 [shape = 's32[1]{0}', space=sflag, size = 0x4, scoped, tag = 'scoped memory for tpu_custom_call.1']
    %13 = vsyncpa [#allocation3], 0
    // Predicated region
    $region2: #{tpu_custom_call.1} parent=1 // pred_check
      _
    $region3: #{tpu_custom_call.1} parent=1 // pred_check_branch
      %15 = sbr.rel (0) target = $region5
    $region4: #{tpu_custom_call.1} parent=1 // pred_region
      _
    $region5: #{tpu_custom_call.1} parent=1 // pred_fallthru
      _
    // Predicated region
    $region6: #{tpu_custom_call.1} parent=1 // pred_check
      _
    $region7: #{tpu_custom_call.1} parent=1 // pred_check_branch
      %17 = sbr.rel (0) target = $region9
    $region8: #{tpu_custom_call.1} parent=1 // pred_region
      _
    $region9: #{tpu_custom_call.1} parent=1 // pred_fallthru
      _
    // Predicated region
    $region10: #{tpu_custom_call.1} parent=1 // pred_check
      _
    $region11: #{tpu_custom_call.1} parent=1 // pred_check_branch
      %19 = sbr.rel (0) target = $region13
    $region12: #{tpu_custom_call.1} parent=1 // pred_region
      _
    $region13: #{tpu_custom_call.1} parent=1 // pred_fallthru
      _
    // Predicated region
    $region14: #{tpu_custom_call.1} parent=1 // pred_check
      _
    $region15: #{tpu_custom_call.1} parent=1 // pred_check_branch
      %21 = sbr.rel (0) target = $region17
    $region16: #{tpu_custom_call.1} parent=1 // pred_region
      _
    $region17: #{tpu_custom_call.1} parent=1 // pred_fallthru
      _
    // Predicated region
    $region18: #{tpu_custom_call.1} parent=1 // pred_check
      _
    $region19: #{tpu_custom_call.1} parent=1 // pred_check_branch
      %23 = sbr.rel (0) target = $region21
    $region20: #{tpu_custom_call.1} parent=1 // pred_region
      _
    $region21: #{tpu_custom_call.1} parent=1 // pred_fallthru
      _
    // Predicated region
    $region22: #{tpu_custom_call.1} parent=1 // pred_check
      _
    $region23: #{tpu_custom_call.1} parent=1 // pred_check_branch
      %25 = sbr.rel (0) target = $region25
    $region24: #{tpu_custom_call.1} parent=1 // pred_region
      _
    $region25: #{tpu_custom_call.1} parent=1 // pred_fallthru
      _
    // Predicated region
    $region26: #{tpu_custom_call.1} parent=1 // pred_check
      _
    $region27: #{tpu_custom_call.1} parent=1 // pred_check_branch
      %27 = sbr.rel (0) target = $region29
    $region28: #{tpu_custom_call.1} parent=1 // pred_region
      _
    $region29: #{tpu_custom_call.1} parent=1 // pred_fallthru
      _
    // Predicated region
    $region30: #{tpu_custom_call.1} parent=1 // pred_check
      _
    $region31: #{tpu_custom_call.1} parent=1 // pred_check_branch
      %29 = sbr.rel (0) target = $region33
    $region32: #{tpu_custom_call.1} parent=1 // pred_region
      _
    $region33: #{tpu_custom_call.1} parent=1 // pred_fallthru
      _
    %v31 = vld [vmem:[%s0] sm:$0xf]
    %v32 = vld [vmem:[%s0 + $0x4] sm:$0xf]
    %v33 = vunpack.c.l.bf16 %v31
    %v34 = vunpack.c.l.bf16 %v32
    %v35 = vmul.f32 %v33, %v33
    %v36 = vmul.f32 %v34, %v34
    %v37 = vld [vmem:[%s0 + $0x8] sm:$0xf]
    %v38 = vld [vmem:[%s0 + $0xc] sm:$0xf]
    %v39 = vunpack.c.l.bf16 %v37
    %v40 = vunpack.c.l.bf16 %v38
    %v41 = vadd.f32 %v33, %v39
    %v42 = vadd.f32 %v34, %v40
    %v43 = vmul.f32 %v39, %v39
    %v44 = vmul.f32 %v40, %v40
    %v45 = vadd.f32 %v35, %v43
    %v46 = vadd.f32 %v36, %v44
    %v47 = vld [vmem:[%s0 + $0x10] sm:$0xf]
    %v48 = vld [vmem:[%s0 + $0x14] sm:$0xf]
    %v49 = vunpack.c.l.bf16 %v47
    %v50 = vunpack.c.l.bf16 %v48
    %v51 = vadd.f32 %v41, %v49
    %v52 = vadd.f32 %v42, %v50
    %v53 = vmul.f32 %v49, %v49
    %v54 = vmul.f32 %v50, %v50
    %v55 = vadd.f32 %v45, %v53
    %v56 = vadd.f32 %v46, %v54
    %v57 = vld [vmem:[%s0 + $0x18] sm:$0xf]
    %v58 = vld [vmem:[%s0 + $0x1c] sm:$0xf]
    %v59 = vunpack.c.l.bf16 %v57
    %v60 = vunpack.c.l.bf16 %v58
    %v61 = vadd.f32 %v51, %v59
    %v62 = vadd.f32 %v52, %v60
    %v63 = vmul.f32 %v59, %v59
    %v64 = vmul.f32 %v60, %v60
    %v65 = vadd.f32 %v55, %v63
    %v66 = vadd.f32 %v56, %v64
    %v67 = vmul.f32 %v61, %v61
    %v68 = vmul.f32 %v62, %v62
    %v69 = vsub.f32 %v67, %v65
    %v70 = vsub.f32 %v68, %v66
    %v71 = vadd.f32 %v69, %v70
    %v72 = vrot.slane %v71, 4
    %v73 = vadd.f32 %v71, %v72
    %v74 = vrot.slane %v73, 2
    %v75 = vadd.f32 %v73, %v74
    %v76 = vrot.slane %v75, 1
    %v77 = vadd.f32 %v75, %v76
    %v78 = vmul.f32 %v77, 0.5
    %v79 = vld [vmem:[%s1] sm:$0xf]
    %v80 = vld [vmem:[%s1 + $0x4] sm:$0xf]
    %v81 = vld [vmem:[%s1 + $0x8] sm:$0xf]
    %v82 = vld [vmem:[%s1 + $0xc] sm:$0xf]
    %v83 = vld [vmem:[%s0] sm:$0xf]
    %v84 = vld [vmem:[%s0 + $0x4] sm:$0xf]
    %v85 = vld [vmem:[%s0 + $0x8] sm:$0xf]
    %v86 = vld [vmem:[%s0 + $0xc] sm:$0xf]
    %v87 = vld [vmem:[%s0 + $0x10] sm:$0xf]
    %v88 = vld [vmem:[%s0 + $0x14] sm:$0xf]
    %v89 = vld [vmem:[%s2] sm:$0xff]
    %v90 = vld [vmem:[%s2 + $0x8] sm:$0xff]
    %v91 = vld [vmem:[%s2 + $0x10] sm:$0xff]
    %v92 = vld [vmem:[%s2 + $0x18] sm:$0xff]
    %94 = vset.pattern.permute.xlu0 0
    %95 = vperm.xlu0 %94, %v89
    %v96 = vpop.permute.xlu0 %95
    %99 = vset.pattern.permute.xlu0 0
    %100 = vperm.xlu0 %99, %v90
    %v101 = vpop.permute.xlu0 %100
    %104 = vset.pattern.permute.xlu0 0
    %105 = vperm.xlu0 %104, %v91
    %v106 = vpop.permute.xlu0 %105
    %109 = vset.pattern.permute.xlu0 0
    %110 = vperm.xlu0 %109, %v92
    %v111 = vpop.permute.xlu0 %110
    %v117 = vunpack.c.l.b16 %v79
    %v118 = vunpack.c.l.b16 %v80
    %v119 = vunpack.c.l.b16 %v81
    %v120 = vunpack.c.l.b16 %v82
    %v121 = vpack.c.b16 %v118, %v117
    %v122 = vpack.c.b16 %v120, %v119
    %v131 = vunpack.c.l.b16 %v83
    %v132 = vunpack.c.l.b16 %v84
    %v133 = vunpack.c.l.b16 %v85
    %v134 = vunpack.c.l.b16 %v86
    %v135 = vunpack.c.l.b16 %v87
    %v136 = vunpack.c.l.b16 %v88
    %v137 = vunpack.c.l.b16 %v57
    %v138 = vunpack.c.l.b16 %v58
    %v139 = vpack.c.b16 %v132, %v131
    %v140 = vpack.c.b16 %v134, %v133
    %v141 = vpack.c.b16 %v136, %v135
    %v142 = vpack.c.b16 %v138, %v137
    %vm147 = vcmask 523264
    %v149 = vsel %vm147, %v121, 0
    %v152 = vsel %vm147, %v122, 0
    %154 = vmatprep.subr.bf16.mxu0 0
    %155 = vmatpush1.bf16.msra.mxu0 %v139
    %156 = vmatprep.subr.bf16.mxu0 0
    %157 = vmatpush1.bf16.msra.mxu0 %v140
    %158 = vmatprep.subr.bf16.mxu0 0
    %159 = vmatpush1.bf16.msra.mxu0 %v141
    %160 = vmatprep.subr.bf16.mxu0 0
    %161 = vmatpush1.bf16.msra.mxu0 %v142
    %162 = vmatprep.subr.bf16.mxu0 0
    %163 = vmatpush1.bf16.msra.mxu0 0
    %164 = vmatprep.subr.bf16.mxu0 0
    %165 = vmatpush1.bf16.msra.mxu0 0
    %166 = vmatprep.subr.bf16.mxu0 0
    %167 = vmatpush1.bf16.msra.mxu0 0
    %168 = vmatprep.subr.bf16.mxu0 0
    %169 = vmatpush1.bf16.msra.mxu0 0
    %170 = vmatprep.subr.bf16.mxu0 0
    %171 = vmatpush1.bf16.msra.mxu0 0
    %172 = vmatprep.subr.bf16.mxu0 0
    %173 = vmatpush1.bf16.msra.mxu0 0
    %174 = vmatprep.subr.bf16.mxu0 0
    %175 = vmatpush1.bf16.msra.mxu0 0
    %176 = vmatprep.subr.bf16.mxu0 0
    %177 = vmatpush1.bf16.msra.mxu0 0
    %178 = vmatprep.subr.bf16.mxu0 0
    %179 = vmatpush1.bf16.msra.mxu0 0
    %180 = vmatprep.subr.bf16.mxu0 0
    %181 = vmatpush1.bf16.msra.mxu0 0
    %182 = vmatprep.subr.bf16.mxu0 0
    %183 = vmatpush1.bf16.msra.mxu0 0
    %184 = vmatprep.subr.bf16.mxu0 0
    %185 = vmatpush1.bf16.msra.mxu0 0
    %186 = vmatprep.mubr.bf16.mxu0 0
    %187 = vmatmul.mubr.bf16.gmra.mrb[0].mxu0 %v149
    %v188 = vpop.f32.mrb[0].mxu0
    %v189 = vadd.f32 %v96, %v188
    %v190 = vpop.f32.mrb[0].mxu0
    %v191 = vpop.f32.mrb[0].mxu0
    %v192 = vadd.f32 %v101, %v191
    %v193 = vpop.f32.mrb[0].mxu0
    %194 = vmatprep.mubr.bf16.mxu0 0
    %195 = vmatmul.mubr.bf16.gmra.mrb[0].mxu0 %v152
    %v196 = vpop.f32.mrb[0].mxu0
    %v197 = vadd.f32 %v106, %v196
    %v198 = vpop.f32.mrb[0].mxu0
    %v199 = vpop.f32.mrb[0].mxu0
    %v200 = vadd.f32 %v111, %v199
    %v201 = vpop.f32.mrb[0].mxu0
    %202 = vdwg.mxu0
    %v203 = vmax.f32 %v189, 0.0
    %v204 = vmax.f32 %v192, 0.0
    %v205 = vmax.f32 %v197, 0.0
    %v206 = vmax.f32 %v200, 0.0
    %v207 = vpack.c.bf16 %v204, %v203
    %v208 = vpack.c.bf16 %v206, %v205
    %v209 = vld [vmem:[%s3] sm:$0xf]
    %v210 = vld [vmem:[%s3 + $0x4] sm:$0xf]
    %v211 = vld [vmem:[%s3 + $0x8] sm:$0xf]
    %v212 = vld [vmem:[%s3 + $0xc] sm:$0xf]
    %v213 = vld [vmem:[%s4] sm:$0xff]
    %v214 = vld [vmem:[%s4 + $0x8] sm:$0xff]
    %v215 = vld [vmem:[%s4 + $0x10] sm:$0xff]
    %v216 = vld [vmem:[%s4 + $0x18] sm:$0xff]
    %218 = vset.pattern.permute.xlu0 0
    %219 = vperm.xlu0 %218, %v213
    %v220 = vpop.permute.xlu0 %219
    %223 = vset.pattern.permute.xlu0 0
    %224 = vperm.xlu0 %223, %v214
    %v225 = vpop.permute.xlu0 %224
    %228 = vset.pattern.permute.xlu0 0
    %229 = vperm.xlu0 %228, %v215
    %v230 = vpop.permute.xlu0 %229
    %233 = vset.pattern.permute.xlu0 0
    %234 = vperm.xlu0 %233, %v216
    %v235 = vpop.permute.xlu0 %234
    %v241 = vunpack.c.l.b16 %v209
    %v242 = vunpack.c.l.b16 %v210
    %v243 = vunpack.c.l.b16 %v211
    %v244 = vunpack.c.l.b16 %v212
    %v245 = vpack.c.b16 %v242, %v241
    %v246 = vpack.c.b16 %v244, %v243
    %vm247 = vcmask 261120
    %v249 = vsel %vm247, %v245, 0
    %v252 = vsel %vm247, %v246, 0
    %254 = vmatprep.subr.bf16.mxu0 0
    %255 = vmatpush1.bf16.msra.mxu0 %v207
    %256 = vmatprep.subr.bf16.mxu0 0
    %257 = vmatpush1.bf16.msra.mxu0 %v208
    %258 = vmatprep.subr.bf16.mxu0 0
    %259 = vmatpush1.bf16.msra.mxu0 0
    %260 = vmatprep.subr.bf16.mxu0 0
    %261 = vmatpush1.bf16.msra.mxu0 0
    %262 = vmatprep.subr.bf16.mxu0 0
    %263 = vmatpush1.bf16.msra.mxu0 0
    %264 = vmatprep.subr.bf16.mxu0 0
    %265 = vmatpush1.bf16.msra.mxu0 0
    %266 = vmatprep.subr.bf16.mxu0 0
    %267 = vmatpush1.bf16.msra.mxu0 0
    %268 = vmatprep.subr.bf16.mxu0 0
    %269 = vmatpush1.bf16.msra.mxu0 0
    %270 = vmatprep.subr.bf16.mxu0 0
    %271 = vmatpush1.bf16.msra.mxu0 0
    %272 = vmatprep.subr.bf16.mxu0 0
    %273 = vmatpush1.bf16.msra.mxu0 0
    %274 = vmatprep.subr.bf16.mxu0 0
    %275 = vmatpush1.bf16.msra.mxu0 0
    %276 = vmatprep.subr.bf16.mxu0 0
    %277 = vmatpush1.bf16.msra.mxu0 0
    %278 = vmatprep.subr.bf16.mxu0 0
    %279 = vmatpush1.bf16.msra.mxu0 0
    %280 = vmatprep.subr.bf16.mxu0 0
    %281 = vmatpush1.bf16.msra.mxu0 0
    %282 = vmatprep.subr.bf16.mxu0 0
    %283 = vmatpush1.bf16.msra.mxu0 0
    %284 = vmatprep.subr.bf16.mxu0 0
    %285 = vmatpush1.bf16.msra.mxu0 0
    %286 = vmatprep.mubr.bf16.mxu0 0
    %287 = vmatmul.mubr.bf16.gmra.mrb[0].mxu0 %v249
    %v288 = vpop.f32.mrb[0].mxu0
    %v289 = vadd.f32 %v220, %v288
    %v290 = vpop.f32.mrb[0].mxu0
    %v291 = vpop.f32.mrb[0].mxu0
    %v292 = vadd.f32 %v225, %v291
    %v293 = vpop.f32.mrb[0].mxu0
    %294 = vmatprep.mubr.bf16.mxu0 0
    %295 = vmatmul.mubr.bf16.gmra.mrb[0].mxu0 %v252
    %v296 = vpop.f32.mrb[0].mxu0
    %v297 = vadd.f32 %v230, %v296
    %v298 = vpop.f32.mrb[0].mxu0
    %v299 = vpop.f32.mrb[0].mxu0
    %v300 = vadd.f32 %v235, %v299
    %v301 = vpop.f32.mrb[0].mxu0
    %302 = vdwg.mxu0
    %v303 = vmax.f32 %v289, 0.0
    %v304 = vmax.f32 %v292, 0.0
    %v305 = vmax.f32 %v297, 0.0
    %v306 = vmax.f32 %v300, 0.0
    %v307 = vpack.c.bf16 %v304, %v303
    %v308 = vpack.c.bf16 %v306, %v305
    %v309 = vld [vmem:[%s5] sm:$0xf]
    %v310 = vld [vmem:[%s5 + $0x4] sm:$0xf]
    %v311 = vld [vmem:[%s5 + $0x8] sm:$0xf]
    %v312 = vld [vmem:[%s5 + $0xc] sm:$0xf]
    %v313 = vld [vmem:[%s6] sm:$0xff]
    %v314 = vld [vmem:[%s6 + $0x8] sm:$0xff]
    %v315 = vld [vmem:[%s6 + $0x10] sm:$0xff]
    %v316 = vld [vmem:[%s6 + $0x18] sm:$0xff]
    %318 = vset.pattern.permute.xlu0 0
    %319 = vperm.xlu0 %318, %v313
    %v320 = vpop.permute.xlu0 %319
    %323 = vset.pattern.permute.xlu0 0
    %324 = vperm.xlu0 %323, %v314
    %v325 = vpop.permute.xlu0 %324
    %328 = vset.pattern.permute.xlu0 0
    %329 = vperm.xlu0 %328, %v315
    %v330 = vpop.permute.xlu0 %329
    %333 = vset.pattern.permute.xlu0 0
    %334 = vperm.xlu0 %333, %v316
    %v335 = vpop.permute.xlu0 %334
    %v341 = vunpack.c.l.b16 %v309
    %v342 = vunpack.c.l.b16 %v310
    %v343 = vunpack.c.l.b16 %v311
    %v344 = vunpack.c.l.b16 %v312
    %v345 = vpack.c.b16 %v342, %v341
    %v346 = vpack.c.b16 %v344, %v343
    %v348 = vsel %vm247, %v345, 0
    %v351 = vsel %vm247, %v346, 0
    %353 = vmatprep.subr.bf16.mxu0 0
    %354 = vmatpush1.bf16.msra.mxu0 %v307
    %355 = vmatprep.subr.bf16.mxu0 0
    %356 = vmatpush1.bf16.msra.mxu0 %v308
    %357 = vmatprep.subr.bf16.mxu0 0
    %358 = vmatpush1.bf16.msra.mxu0 0
    %359 = vmatprep.subr.bf16.mxu0 0
    %360 = vmatpush1.bf16.msra.mxu0 0
    %361 = vmatprep.subr.bf16.mxu0 0
    %362 = vmatpush1.bf16.msra.mxu0 0
    %363 = vmatprep.subr.bf16.mxu0 0
    %364 = vmatpush1.bf16.msra.mxu0 0
    %365 = vmatprep.subr.bf16.mxu0 0
    %366 = vmatpush1.bf16.msra.mxu0 0
    %367 = vmatprep.subr.bf16.mxu0 0
    %368 = vmatpush1.bf16.msra.mxu0 0
    %369 = vmatprep.subr.bf16.mxu0 0
    %370 = vmatpush1.bf16.msra.mxu0 0
    %371 = vmatprep.subr.bf16.mxu0 0
    %372 = vmatpush1.bf16.msra.mxu0 0
    %373 = vmatprep.subr.bf16.mxu0 0
    %374 = vmatpush1.bf16.msra.mxu0 0
    %375 = vmatprep.subr.bf16.mxu0 0
    %376 = vmatpush1.bf16.msra.mxu0 0
    %377 = vmatprep.subr.bf16.mxu0 0
    %378 = vmatpush1.bf16.msra.mxu0 0
    %379 = vmatprep.subr.bf16.mxu0 0
    %380 = vmatpush1.bf16.msra.mxu0 0
    %381 = vmatprep.subr.bf16.mxu0 0
    %382 = vmatpush1.bf16.msra.mxu0 0
    %383 = vmatprep.subr.bf16.mxu0 0
    %384 = vmatpush1.bf16.msra.mxu0 0
    %385 = vmatprep.mubr.bf16.mxu0 0
    %386 = vmatmul.mubr.bf16.gmra.mrb[0].mxu0 %v348
    %v387 = vpop.f32.mrb[0].mxu0
    %v388 = vadd.f32 %v320, %v387
    %v389 = vpop.f32.mrb[0].mxu0
    %v390 = vpop.f32.mrb[0].mxu0
    %v391 = vadd.f32 %v325, %v390
    %v392 = vpop.f32.mrb[0].mxu0
    %393 = vmatprep.mubr.bf16.mxu0 0
    %394 = vmatmul.mubr.bf16.gmra.mrb[0].mxu0 %v351
    %v395 = vpop.f32.mrb[0].mxu0
    %v396 = vadd.f32 %v330, %v395
    %v397 = vpop.f32.mrb[0].mxu0
    %v398 = vpop.f32.mrb[0].mxu0
    %v399 = vadd.f32 %v335, %v398
    %v400 = vpop.f32.mrb[0].mxu0
    %401 = vdwg.mxu0
    %v402 = vmax.f32 %v388, 0.0
    %v403 = vmax.f32 %v391, 0.0
    %v404 = vmax.f32 %v396, 0.0
    %v405 = vmax.f32 %v399, 0.0
    %v406 = vld [vmem:[%s7] sm:$0xff]
    %v407 = vld [vmem:[%s7 + $0x8] sm:$0xff]
    %v408 = vld [vmem:[%s7 + $0x10] sm:$0xff]
    %v409 = vld [vmem:[%s7 + $0x18] sm:$0xff]
    %411 = vset.pattern.permute.xlu0 0
    %412 = vperm.xlu0 %411, %v406
    %v413 = vpop.permute.xlu0 %412
    %416 = vset.pattern.permute.xlu0 0
    %417 = vperm.xlu0 %416, %v407
    %v418 = vpop.permute.xlu0 %417
    %421 = vset.pattern.permute.xlu0 0
    %422 = vperm.xlu0 %421, %v408
    %v423 = vpop.permute.xlu0 %422
    %426 = vset.pattern.permute.xlu0 0
    %427 = vperm.xlu0 %426, %v409
    %v428 = vpop.permute.xlu0 %427
    %v430 = vmul.f32 %v402, %v413
    %v431 = vmul.f32 %v403, %v418
    %v432 = vmul.f32 %v404, %v423
    %v433 = vmul.f32 %v405, %v428
    %v434 = vadd.f32 %v430, %v431
    %v435 = vadd.f32 %v434, %v432
    %v436 = vadd.f32 %v435, %v433
    %v437 = vrot.slane %v436, 4
    %v438 = vadd.f32 %v436, %v437
    %v439 = vrot.slane %v438, 2
    %v440 = vadd.f32 %v438, %v439
    %v441 = vrot.slane %v440, 1
    %v442 = vadd.f32 %v440, %v441
    %v443 = vadd.f32 %v78, %v442
    %444 = vst [vmem:[#allocation2] sm:$0x1] %v443
    // Predicated region
    $region34: #{tpu_custom_call.1} parent=1 // pred_check
      _
    $region35: #{tpu_custom_call.1} parent=1 // pred_check_branch
      %446 = sbr.rel (0) target = $region37
    $region36: #{tpu_custom_call.1} parent=1 // pred_region
      %s448 = ssub.s32 16, 16
      %449 = vsyncadd [#allocation3], %s448
      %s451 = sshll.u32 [#allocation2], 4
      %s452 = int_to_ptr.vmem [resolvable:$true] %s451
      %454 = dma.vmem_to_hbm [thread:$0]  %s452, 16, %s8, [#allocation3]
    $region37: #{tpu_custom_call.1} parent=1 // pred_fallthru
      _
    // Predicated region
    $region38: #{tpu_custom_call.1} parent=1 // pred_check
      _
    $region39: #{tpu_custom_call.1} parent=1 // pred_check_branch
      %456 = sbr.rel (0) target = $region41
    $region40: #{tpu_custom_call.1} parent=1 // pred_region
      %457 = dma.done [#allocation3], 16
    $region41: #{tpu_custom_call.1} parent=1 // pred_fallthru
      _
    %458 = vsyncpa [#allocation3], 1

</llo_original>
